<compile_context>
chip_gen: v5e
topology: v5e:2x2
jax: 0.10.0
libtpu: 0.0.40
codegen_flags: <defaults>
</compile_context>

<pallas_src>
import jax
import jax.numpy as jnp
import numpy as np
from jax.experimental import pallas as pl
from jax.experimental.pallas import tpu as pltpu

HIDDEN = 32
USE_COVERAGE = True


def attention_kernel(enc_ref, dec_ref, aw_ref, tmf_ref, sm_ref, wu_ref, ext_ref,
                     ctx_ref, weight_ref):
    """Whole-batch concat+coverage attention in one kernel invocation.

    enc_ref : (B, L, H)  encoder states
    dec_ref : (B, H)     decoder state
    aw_ref  : (B, L, T)  attention-weight history (coverage)
    tmf_ref : (B, T, 1)  trg_mask / fertility (per-batch column)
    sm_ref  : (B, 1, L)  src mask, 1.0 == masked (lane-dense over L)
    wu_ref  : (2, H, H)  [0] = W_w.T, [1] = U_w.T
    ext_ref : (3, H)     [0] = U_b, [1] = V_w.T row, [2] = A_w row
    ctx_ref    : (B, 1, H)  context output
    weight_ref : (B, 1, L)  attention weights output (lane-dense over L)
    """
    enc = enc_ref[...]                      # (B, L, H)
    dec = dec_ref[...]                      # (B, H)
    aw = aw_ref[...]                        # (B, L, T)
    tmf = tmf_ref[...]                      # (B, T, 1)
    sm = sm_ref[...]                        # (B, 1, L)
    w_t = wu_ref[0]                         # (H, H)
    u_t = wu_ref[1]                         # (H, H)
    ext = ext_ref[...]                      # (3, H)
    u_b = ext[0:1, :]                       # (1, H)
    v_row = ext[1:2, :]                     # (1, H)
    a_row = ext[2:3, :]                     # (1, H)

    B, L, H = enc.shape

    # coverage[b, l] = sum_t aw[b, l, t] * trg_mask[t, b] / fertility
    # (1/fertility already folded into tmf). Batched MXU matvec, not an XLU sum.
    cov = jnp.einsum('blt,btq->blq', aw, tmf,
                     preferred_element_type=jnp.float32)                # (B, L, 1)

    # W(h_t): one (B, H) @ (H, H) matmul for the whole batch (hoisted out of any
    # per-batch loop).
    wh = jnp.dot(dec, w_t, preferred_element_type=jnp.float32)          # (B, H)

    # U(encoder_states) + bias: batch folded onto MXU rows -> single (B*L, H) matmul.
    ue = jnp.dot(enc.reshape(B * L, H), u_t,
                 preferred_element_type=jnp.float32).reshape(B, L, H)   # (B, L, H)

    pre = ue + u_b[None] + wh[:, None, :] + cov * v_row[None]
    th = jnp.tanh(pre)                                                  # (B, L, H)

    # alignment scores, lane-dense over L: score[b, 0, l] = a . tanh(...)[b, l, :]
    a3 = jnp.broadcast_to(a_row[None], (B, 1, H))
    score = jnp.einsum('bqh,blh->bql', a3, th,
                       preferred_element_type=jnp.float32)              # (B, 1, L)

    # src mask (matches torch.where(src_mask, -700, score))
    score = jnp.where(sm > 0.5, jnp.full_like(score, -700.0), score)

    # softmax over the source-length (lane) axis
    m = jnp.max(score, axis=-1, keepdims=True)                          # (B, 1, 1)
    e = jnp.exp(score - m)                                              # (B, 1, L)
    denom = jnp.sum(e, axis=-1, keepdims=True)                          # (B, 1, 1)
    # approx=False keeps 1e-5 parity with the reference; this kernel is
    # overhead-bound so the EUP-vs-VALU slot difference is in the noise.
    w = e * pl.reciprocal(denom, approx=False)                          # (B, 1, L)

    # context = weight^T @ encoder_states, batched MXU matmul (not an XLU reduce).
    ctx = jnp.einsum('bql,blh->bqh', w, enc,
                     preferred_element_type=jnp.float32)                # (B, 1, H)

    ctx_ref[...] = ctx
    weight_ref[...] = w


def attention_concat_coverage(decoder_state, encoder_states, attn_weights,
                              src_mask, trg_mask, fertility, params):
    """Glue: rearranges PyTorch-convention inputs and calls the Pallas kernel.

    decoder_state : (1, B, H)    encoder_states : (L, B, H)
    attn_weights  : (B, L, T)    src_mask       : (L, B) bool
    trg_mask      : (T, B)       fertility      : python float
    """
    # TODO(synk): the dynamic zero-padding branch (attn_weights.size(2) != trg_mask.size(0))
    # needs dynamic shapes and is not expressible in a static-shape Pallas kernel;
    # we require attn_weights to already span the full target length.
    L, B, H = encoder_states.shape
    T = trg_mask.shape[0]
    assert attn_weights.shape == (B, L, T)

    enc3 = jnp.transpose(encoder_states, (1, 0, 2)).astype(jnp.float32)       # (B, L, H)
    dec = decoder_state[0].astype(jnp.float32)                                # (B, H)
    aw3 = attn_weights.astype(jnp.float32)                                    # (B, L, T)
    tmf3 = (jnp.transpose(trg_mask, (1, 0)).astype(jnp.float32)
            / jnp.float32(fertility))[:, :, None]                             # (B, T, 1)
    sm3 = jnp.transpose(src_mask, (1, 0)).astype(jnp.float32)[:, None, :]     # (B, 1, L)

    # nn.Linear does x @ W.T (+ b); pre-transpose and pack weights (fewer, wider DMAs).
    wu = jnp.stack([params["W_w"].T, params["U_w"].T]).astype(jnp.float32)    # (2, H, H)
    ext = jnp.stack([params["U_b"],
                     params["V_w"][:, 0],
                     params["A_w"][0, :]]).astype(jnp.float32)                # (3, H)

    vmem_spec = pl.BlockSpec(memory_space=pltpu.MemorySpace.VMEM)
    ctx3, w3 = pl.pallas_call(
        attention_kernel,
        out_shape=(jax.ShapeDtypeStruct((B, 1, H), jnp.float32),
                   jax.ShapeDtypeStruct((B, 1, L), jnp.float32)),
        in_specs=[vmem_spec] * 7,
        out_specs=(vmem_spec, vmem_spec),
    )(enc3, dec, aw3, tmf3, sm3, wu, ext)

    context = ctx3[:, 0, :]                            # (B, H)
    weight = jnp.transpose(w3, (0, 2, 1))              # (B, L, 1) — layout plumbing only
    return context, weight


def reference_forward(decoder_state, encoder_states, attn_weights,
                      src_mask, trg_mask, fertility, params):
    """Pure-JAX mirror of the PyTorch forward (method='concat', USE_COVERAGE=True)."""
    enc = jnp.transpose(encoder_states, (1, 0, 2))                 # (B, L, H)
    B, L, H = enc.shape
    h_t = jnp.transpose(decoder_state, (1, 0, 2))                  # (B, 1, H)
    h_t = jnp.broadcast_to(h_t, (B, L, H))

    aw = jnp.transpose(attn_weights, (1, 0, 2))[:, :, None, :]     # (L, B, 1, T)
    tm = jnp.transpose(trg_mask, (1, 0)).astype(jnp.float32)[:, :, None]  # (B, T, 1)
    acc = jnp.matmul(aw, tm)[:, :, 0, 0]                           # (L, B)
    coverage = (jnp.transpose(acc, (1, 0)) / fertility)[:, :, None]  # (B, L, 1)

    pre = (h_t @ params["W_w"].T
           + enc @ params["U_w"].T + params["U_b"]
           + coverage @ params["V_w"].T)
    score = jnp.tanh(pre) @ params["A_w"].T                        # (B, L, 1)

    sm = jnp.transpose(src_mask, (1, 0))[:, :, None]               # (B, L, 1)
    score = jnp.where(sm, jnp.full_like(score, -700.0), score)
    weight = jax.nn.softmax(score, axis=1)
    context = jnp.matmul(jnp.transpose(weight, (0, 2, 1)), enc)[:, 0, :]
    return context, weight


if __name__ == "__main__":
    B, L, T, H = 2, 16, 8, HIDDEN
    key = jax.random.PRNGKey(0)
    ks = jax.random.split(key, 10)

    # Deterministic parameter init (nn.Linear shapes from __init__).
    scale = 1.0 / np.sqrt(H)
    params = {
        "W_w": jax.random.uniform(ks[0], (H, H), jnp.float32, -scale, scale),  # matrix_W (no bias)
        "U_w": jax.random.uniform(ks[1], (H, H), jnp.float32, -scale, scale),  # matrix_U
        "U_b": jax.random.uniform(ks[2], (H,), jnp.float32, -scale, scale),    # matrix_U bias
        "A_w": jax.random.uniform(ks[3], (1, H), jnp.float32, -scale, scale),  # alignment_layer
        "V_w": jax.random.uniform(ks[4], (H, 1), jnp.float32, -1.0, 1.0),      # matrix_V
    }

    # Inputs in PyTorch axis conventions.
    decoder_state = jax.random.normal(ks[5], (1, B, H), jnp.float32)
    encoder_states = jax.random.normal(ks[6], (L, B, H), jnp.float32)
    attn_weights = jax.random.uniform(ks[7], (B, L, T), jnp.float32)
    src_mask = jax.random.bernoulli(ks[8], 0.25, (L, B))            # True == masked
    trg_mask = jax.random.bernoulli(ks[9], 0.8, (T, B)).astype(jnp.float32)
    fertility = 2.0

    context, weight = attention_concat_coverage(
        decoder_state, encoder_states, attn_weights, src_mask, trg_mask,
        fertility, params)
    context = jax.block_until_ready(context)
    weight = jax.block_until_ready(weight)

    ref_ctx, ref_w = reference_forward(
        decoder_state, encoder_states, attn_weights, src_mask, trg_mask,
        fertility, params)

    np.testing.assert_allclose(np.asarray(context), np.asarray(ref_ctx),
                               rtol=1e-5, atol=1e-5)
    np.testing.assert_allclose(np.asarray(weight), np.asarray(ref_w),
                               rtol=1e-5, atol=1e-5)
    print("KERNEL_OK")
</pallas_src>

<mosaic_0001>
module attributes {stable_mosaic.version = 11 : i64} {
  func.func @attention_kernel(%arg0: memref<2x16x32xf32, #tpu.memory_space<vmem>>, %arg1: memref<2x32xf32, #tpu.memory_space<vmem>>, %arg2: memref<2x16x8xf32, #tpu.memory_space<vmem>>, %arg3: memref<2x8x1xf32, #tpu.memory_space<vmem>>, %arg4: memref<2x1x16xf32, #tpu.memory_space<vmem>>, %arg5: memref<2x32x32xf32, #tpu.memory_space<vmem>>, %arg6: memref<3x32xf32, #tpu.memory_space<vmem>>, %arg7: memref<2x1x32xf32, #tpu.memory_space<vmem>>, %arg8: memref<2x1x16xf32, #tpu.memory_space<vmem>>) attributes {dimension_semantics = [], scalar_prefetch = 0 : i64, scratch_operands = 0 : i64, tpu.core_type = #tpu.core_type<tc>} {
    %c0 = arith.constant 0 : index
    %c0_0 = arith.constant 0 : index
    %c0_1 = arith.constant 0 : index
    %0 = vector.load %arg0[%c0, %c0_0, %c0_1] : memref<2x16x32xf32, #tpu.memory_space<vmem>>, vector<2x16x32xf32>
    %c0_2 = arith.constant 0 : index
    %c0_3 = arith.constant 0 : index
    %1 = vector.load %arg1[%c0_2, %c0_3] : memref<2x32xf32, #tpu.memory_space<vmem>>, vector<2x32xf32>
    %c0_4 = arith.constant 0 : index
    %c0_5 = arith.constant 0 : index
    %c0_6 = arith.constant 0 : index
    %2 = vector.load %arg2[%c0_4, %c0_5, %c0_6] : memref<2x16x8xf32, #tpu.memory_space<vmem>>, vector<2x16x8xf32>
    %c0_7 = arith.constant 0 : index
    %c0_8 = arith.constant 0 : index
    %c0_9 = arith.constant 0 : index
    %3 = vector.load %arg3[%c0_7, %c0_8, %c0_9] : memref<2x8x1xf32, #tpu.memory_space<vmem>>, vector<2x8x1xf32>
    %c0_10 = arith.constant 0 : index
    %c0_11 = arith.constant 0 : index
    %c0_12 = arith.constant 0 : index
    %4 = vector.load %arg4[%c0_10, %c0_11, %c0_12] : memref<2x1x16xf32, #tpu.memory_space<vmem>>, vector<2x1x16xf32>
    %c0_13 = arith.constant 0 : index
    %c0_14 = arith.constant 0 : index
    %c0_15 = arith.constant 0 : index
    %5 = vector.load %arg5[%c0_13, %c0_14, %c0_15] : memref<2x32x32xf32, #tpu.memory_space<vmem>>, vector<1x32x32xf32>
    %6 = vector.shape_cast %5 : vector<1x32x32xf32> to vector<32x32xf32>
    %c1 = arith.constant 1 : index
    %c0_16 = arith.constant 0 : index
    %c0_17 = arith.constant 0 : index
    %7 = vector.load %arg5[%c1, %c0_16, %c0_17] : memref<2x32x32xf32, #tpu.memory_space<vmem>>, vector<1x32x32xf32>
    %8 = vector.shape_cast %7 : vector<1x32x32xf32> to vector<32x32xf32>
    %c0_18 = arith.constant 0 : index
    %c0_19 = arith.constant 0 : index
    %9 = vector.load %arg6[%c0_18, %c0_19] : memref<3x32xf32, #tpu.memory_space<vmem>>, vector<3x32xf32>
    %10 = vector.extract_strided_slice %9 {offsets = [0, 0], sizes = [1, 32], strides = [1, 1]} : vector<3x32xf32> to vector<1x32xf32>
    %11 = vector.extract_strided_slice %9 {offsets = [1, 0], sizes = [1, 32], strides = [1, 1]} : vector<3x32xf32> to vector<1x32xf32>
    %12 = vector.extract_strided_slice %9 {offsets = [2, 0], sizes = [1, 32], strides = [1, 1]} : vector<3x32xf32> to vector<1x32xf32>
    "tpu.trace_start"() <{level = 10 : i32, message = "blt,btq->blq"}> : () -> ()
    %cst = arith.constant dense<0.000000e+00> : vector<2x16x1xf32>
    %13 = tpu.matmul %2, %3, %cst {dimension_numbers = #tpu.dot_dimension_numbers<[2], [1], [1], [2], [0, 0, 0, 1, 1, 2], [0], [0]>} : vector<2x16x8xf32>, vector<2x8x1xf32>, vector<2x16x1xf32> -> vector<2x16x1xf32>
    "tpu.trace_stop"() : () -> ()
    %cst_20 = arith.constant dense<0.000000e+00> : vector<2x32xf32>
    %14 = tpu.matmul %1, %6, %cst_20 {dimension_numbers = #tpu.dot_dimension_numbers<[1], [0], [0], [1], [0, 0, 1, 1], [], []>} : vector<2x32xf32>, vector<32x32xf32>, vector<2x32xf32> -> vector<2x32xf32>
    %15 = vector.shape_cast %0 : vector<2x16x32xf32> to vector<32x32xf32>
    %cst_21 = arith.constant dense<0.000000e+00> : vector<32x32xf32>
    %16 = tpu.matmul %15, %8, %cst_21 {dimension_numbers = #tpu.dot_dimension_numbers<[1], [0], [0], [1], [0, 0, 1, 1], [], []>} : vector<32x32xf32>, vector<32x32xf32>, vector<32x32xf32> -> vector<32x32xf32>
    %17 = vector.shape_cast %16 : vector<32x32xf32> to vector<2x16x32xf32>
    %18 = vector.shape_cast %10 : vector<1x32xf32> to vector<1x1x32xf32>
    %19 = vector.broadcast %18 : vector<1x1x32xf32> to vector<2x16x32xf32>
    %20 = arith.addf %17, %19 : vector<2x16x32xf32>
    %21 = vector.shape_cast %14 : vector<2x32xf32> to vector<2x1x32xf32>
    %22 = vector.broadcast %21 : vector<2x1x32xf32> to vector<2x16x32xf32>
    %23 = arith.addf %20, %22 : vector<2x16x32xf32>
    %24 = vector.shape_cast %11 : vector<1x32xf32> to vector<1x1x32xf32>
    %25 = vector.broadcast %13 : vector<2x16x1xf32> to vector<2x16x32xf32>
    %26 = vector.broadcast %24 : vector<1x1x32xf32> to vector<2x16x32xf32>
    %27 = arith.mulf %25, %26 : vector<2x16x32xf32>
    %28 = arith.addf %23, %27 : vector<2x16x32xf32>
    %29 = math.tanh %28 : vector<2x16x32xf32>
    %30 = vector.shape_cast %12 : vector<1x32xf32> to vector<1x1x32xf32>
    %31 = vector.shape_cast %30 : vector<1x1x32xf32> to vector<1x1x32xf32>
    %32 = vector.broadcast %31 : vector<1x1x32xf32> to vector<2x1x32xf32>
    "tpu.trace_start"() <{level = 10 : i32, message = "bqh,blh->bql"}> : () -> ()
    %cst_22 = arith.constant dense<0.000000e+00> : vector<2x1x16xf32>
    %33 = tpu.matmul %32, %29, %cst_22 {dimension_numbers = #tpu.dot_dimension_numbers<[2], [2], [1], [1], [0, 0, 0, 1, 1, 1], [0], [0]>} : vector<2x1x32xf32>, vector<2x16x32xf32>, vector<2x1x16xf32> -> vector<2x1x16xf32>
    %cst_23 = arith.constant 5.000000e-01 : f32
    "tpu.trace_stop"() : () -> ()
    %34 = vector.broadcast %cst_23 : f32 to vector<2x1x16xf32>
    %35 = arith.cmpf ogt, %4, %34 : vector<2x1x16xf32>
    %cst_24 = arith.constant -7.000000e+02 : f32
    %36 = vector.broadcast %cst_24 : f32 to vector<2x1x16xf32>
    %37 = arith.select %35, %36, %33 : vector<2x1x16xi1>, vector<2x1x16xf32>
    %cst_25 = arith.constant dense<0xFF800000> : vector<2x1xf32>
    %38 = vector.multi_reduction <maximumf>, %37, %cst_25 [2] : vector<2x1x16xf32> to vector<2x1xf32>
    %39 = vector.shape_cast %38 : vector<2x1xf32> to vector<2x1x1xf32>
    %40 = vector.broadcast %39 : vector<2x1x1xf32> to vector<2x1x16xf32>
    %41 = arith.subf %37, %40 : vector<2x1x16xf32>
    %42 = math.exp %41 : vector<2x1x16xf32>
    %cst_26 = arith.constant dense<0.000000e+00> : vector<2x1xf32>
    %43 = vector.multi_reduction <add>, %42, %cst_26 [2] : vector<2x1x16xf32> to vector<2x1xf32>
    %44 = vector.shape_cast %43 : vector<2x1xf32> to vector<2x1x1xf32>
    %45 = tpu.reciprocal %44 : vector<2x1x1xf32> -> vector<2x1x1xf32>
    %46 = vector.broadcast %45 : vector<2x1x1xf32> to vector<2x1x16xf32>
    %47 = arith.mulf %42, %46 : vector<2x1x16xf32>
    "tpu.trace_start"() <{level = 10 : i32, message = "bql,blh->bqh"}> : () -> ()
    %cst_27 = arith.constant dense<0.000000e+00> : vector<2x1x32xf32>
    %48 = tpu.matmul %47, %0, %cst_27 {dimension_numbers = #tpu.dot_dimension_numbers<[2], [1], [1], [2], [0, 0, 0, 1, 1, 2], [0], [0]>} : vector<2x1x16xf32>, vector<2x16x32xf32>, vector<2x1x32xf32> -> vector<2x1x32xf32>
    "tpu.trace_stop"() : () -> ()
    %c0_28 = arith.constant 0 : index
    %c0_29 = arith.constant 0 : index
    %c0_30 = arith.constant 0 : index
    %49 = vector.load %arg7[%c0_28, %c0_29, %c0_30] : memref<2x1x32xf32, #tpu.memory_space<vmem>>, vector<2x1x32xf32>
    tpu.vector_store %arg7[%c0_28, %c0_29, %c0_30], %48 {strides = array<i32>} : memref<2x1x32xf32, #tpu.memory_space<vmem>>, vector<2x1x32xf32>,
    %c0_31 = arith.constant 0 : index
    %c0_32 = arith.constant 0 : index
    %c0_33 = arith.constant 0 : index
    %50 = vector.load %arg8[%c0_31, %c0_32, %c0_33] : memref<2x1x16xf32, #tpu.memory_space<vmem>>, vector<2x1x16xf32>
    tpu.vector_store %arg8[%c0_31, %c0_32, %c0_33], %47 {strides = array<i32>} : memref<2x1x16xf32, #tpu.memory_space<vmem>>, vector<2x1x16xf32>,
    return
  }
}

</mosaic_0001>

<llo_original>
// kernel: tpu_custom_call.1
$region0: #{tpu_custom_call.1}
  #allocation0 [shape = 'u32[]', space=smem, size = 0x4, offset = 0x4, fixed_abs, tag = 'smem constant byte address 0x4 - core index']
  #allocation1 [shape = 'u32[72,128]{1,0:T(1,128)}', space=vmem, size = 0x9000, scoped, tag = 'internal scratch']
  %s0 = inlined_call_operand.vmem [shape: f32[2,16,32], index: 0, kind: input, shape index: {}]
  %s1 = inlined_call_operand.vmem [shape: f32[2,32], index: 1, kind: input, shape index: {}]
  %s2 = inlined_call_operand.vmem [shape: f32[2,16,8], index: 2, kind: input, shape index: {}]
  %s3 = inlined_call_operand.vmem [shape: f32[2,8,1], index: 3, kind: input, shape index: {}]
  %s4 = inlined_call_operand.vmem [shape: f32[2,1,16], index: 4, kind: input, shape index: {}]
  %s5 = inlined_call_operand.hbm [shape: f32[2,32,32], index: 5, kind: input, shape index: {}]
  %s6 = inlined_call_operand.vmem [shape: f32[3,32], index: 6, kind: input, shape index: {}]
  %s7 = inlined_call_operand.hbm [shape: f32[2,1,32], index: 7, kind: output, shape index: {0}]
  %s8 = inlined_call_operand.hbm [shape: f32[2,1,16], index: 8, kind: output, shape index: {1}]
  %9 = xla_tuple %s7, %s8
  %s10 = sld [smem:[#allocation0]]
  $region50: #{tpu_custom_call.1} parent=0
    _
  %s12 = ssub.s32 1, %s10
  %s13 = scalar_select 0, %s12, %s10
  $region1: #{tpu_custom_call.1} parent=0
    #allocation2 [shape = 'u8[32768]{0}', space=vmem, size = 0x8000, scoped, tag = 'input window, operand 5, single buffered']
    #allocation3 [shape = 's32[1]{0}', space=sflag, size = 0x4, scoped, tag = 'scoped memory for tpu_custom_call.1']
    #allocation4 [shape = 's32[1]{0}', space=sflag, size = 0x4, scoped, tag = 'scoped memory for tpu_custom_call.1']
    #allocation5 [shape = 'u8[1024]{0}', space=vmem, size = 0x400, scoped, tag = 'output window, operand 0, single buffered']
    #allocation6 [shape = 'u8[1024]{0}', space=vmem, size = 0x400, scoped, tag = 'output window, operand 1, single buffered']
    #allocation7 [shape = 's32[1]{0}', space=sflag, size = 0x4, scoped, tag = 'scoped memory for tpu_custom_call.1']
    %14 = vsyncpa [#allocation3], 0
    %15 = vsyncpa [#allocation4], 0
    %16 = vsyncpa [#allocation7], 0
    // Predicated region
    $region2: #{tpu_custom_call.1} parent=1 // pred_check
      _
    $region3: #{tpu_custom_call.1} parent=1 // pred_check_branch
      %18 = sbr.rel (0) target = $region5
    $region4: #{tpu_custom_call.1} parent=1 // pred_region
      _
    $region5: #{tpu_custom_call.1} parent=1 // pred_fallthru
      _
    // Predicated region
    $region6: #{tpu_custom_call.1} parent=1 // pred_check
      _
    $region7: #{tpu_custom_call.1} parent=1 // pred_check_branch
      %20 = sbr.rel (0) target = $region9
    $region8: #{tpu_custom_call.1} parent=1 // pred_region
      _
    $region9: #{tpu_custom_call.1} parent=1 // pred_fallthru
      _
    // Predicated region
    $region10: #{tpu_custom_call.1} parent=1 // pred_check
      _
    $region11: #{tpu_custom_call.1} parent=1 // pred_check_branch
      %22 = sbr.rel (0) target = $region13
    $region12: #{tpu_custom_call.1} parent=1 // pred_region
      _
    $region13: #{tpu_custom_call.1} parent=1 // pred_fallthru
      _
    // Predicated region
    $region14: #{tpu_custom_call.1} parent=1 // pred_check
      _
    $region15: #{tpu_custom_call.1} parent=1 // pred_check_branch
      %24 = sbr.rel (0) target = $region17
    $region16: #{tpu_custom_call.1} parent=1 // pred_region
      _
    $region17: #{tpu_custom_call.1} parent=1 // pred_fallthru
      _
    // Predicated region
    $region18: #{tpu_custom_call.1} parent=1 // pred_check
      _
    $region19: #{tpu_custom_call.1} parent=1 // pred_check_branch
      %26 = sbr.rel (0) target = $region21
    $region20: #{tpu_custom_call.1} parent=1 // pred_region
      _
    $region21: #{tpu_custom_call.1} parent=1 // pred_fallthru
      _
    // Predicated region
    $region22: #{tpu_custom_call.1} parent=1 // pred_check
      _
    $region23: #{tpu_custom_call.1} parent=1 // pred_check_branch
      %28 = sbr.rel (0) target = $region25
    $region24: #{tpu_custom_call.1} parent=1 // pred_region
      %30 = vsyncadd [#allocation3], 0
      %s31 = sshll.u32 %s5, 4
      %s32 = int_to_ptr.hbm [resolvable:$true] %s31
      %s33 = sshll.u32 [#allocation2], 4
      %s34 = int_to_ptr.vmem [resolvable:$true] %s33
      %39 = dma.hbm_to_vmem [thread:$0]  %s32, 1024, %s34, [#allocation3], 128, 128, 8
    $region25: #{tpu_custom_call.1} parent=1 // pred_fallthru
      _
    // Predicated region
    $region26: #{tpu_custom_call.1} parent=1 // pred_check
      _
    $region27: #{tpu_custom_call.1} parent=1 // pred_check_branch
      %41 = sbr.rel (0) target = $region29
    $region28: #{tpu_custom_call.1} parent=1 // pred_region
      _
    $region29: #{tpu_custom_call.1} parent=1 // pred_fallthru
      _
    // Predicated region
    $region30: #{tpu_custom_call.1} parent=1 // pred_check
      _
    $region31: #{tpu_custom_call.1} parent=1 // pred_check_branch
      %43 = sbr.rel (0) target = $region33
    $region32: #{tpu_custom_call.1} parent=1 // pred_region
      %45 = dma.done [#allocation3], 1024
    $region33: #{tpu_custom_call.1} parent=1 // pred_fallthru
      _
    %v46 = vld [vmem:[%s0] sm:$0xff]
    %v47 = vld [vmem:[%s0 + $0x8] sm:$0xff]
    %v48 = vld [vmem:[%s0 + $0x10] sm:$0xff]
    %v49 = vld [vmem:[%s0 + $0x18] sm:$0xff]
    %v50 = vld [vmem:[%s1] sm:$0x3]
    %v51 = vld [vmem:[%s2] sm:$0xff]
    %v52 = vld [vmem:[%s2 + $0x8] sm:$0xff]
    %v53 = vld [vmem:[%s2 + $0x10] sm:$0xff]
    %v54 = vld [vmem:[%s2 + $0x18] sm:$0xff]
    %v55 = vld [vmem:[%s3] sm:$0xff]
    %v56 = vld [vmem:[%s3 + $0x8] sm:$0xff]
    %v57 = vld [vmem:[%s4] sm:$0x1]
    %v58 = vld [vmem:[%s4 + $0x1] sm:$0x1]
    %v59 = vld [vmem:[#allocation2] sm:$0xff]
    %v60 = vld [vmem:[#allocation2 + $0x8] sm:$0xff]
    %v61 = vld [vmem:[#allocation2 + $0x10] sm:$0xff]
    %v62 = vld [vmem:[#allocation2 + $0x18] sm:$0xff]
    %s63 = scalar_lea.vmem [#allocation2], 32
    %v64 = vld [vmem:[%s63] sm:$0xff]
    %v65 = vld [vmem:[%s63 + $0x8] sm:$0xff]
    %v66 = vld [vmem:[%s63 + $0x10] sm:$0xff]
    %v67 = vld [vmem:[%s63 + $0x18] sm:$0xff]
    %v68 = vld [vmem:[%s6] sm:$0x7]
    %vm69 = vcmask 64512
    %v71 = vsel %vm69, %v51, 0
    %v74 = vsel %vm69, %v52, 0
    %76 = vmatpush.msra.mxu0 0.0
    %77 = vmatpush.msra.mxu0 0.0
    %78 = vmatpush.msra.mxu0 0.0
    %79 = vmatpush.msra.mxu0 0.0
    %80 = vmatpush.msra.mxu0 0.0
    %81 = vmatpush.msra.mxu0 0.0
    %82 = vmatpush.msra.mxu0 0.0
    %83 = vmatpush.msra.mxu0 0.0
    %84 = vmatpush.msra.mxu0 0.0
    %85 = vmatpush.msra.mxu0 0.0
    %86 = vmatpush.msra.mxu0 0.0
    %87 = vmatpush.msra.mxu0 0.0
    %88 = vmatpush.msra.mxu0 0.0
    %89 = vmatpush.msra.mxu0 0.0
    %90 = vmatpush.msra.mxu0 0.0
    %91 = vmatpush.msra.mxu0 %v55
    %92 = vmatmul.f32.gmra.mxu0 %v71
    %v93 = vpop.f32.mrf.mxu0
    %v94 = vadd.f32 0.0, %v93
    %95 = vmatmul.f32.gmra.mxu0 %v74
    %v96 = vpop.f32.mrf.mxu0
    %v97 = vadd.f32 0.0, %v96
    %98 = vdwg.mxu0
    %v100 = vsel %vm69, %v53, 0
    %v103 = vsel %vm69, %v54, 0
    %105 = vmatpush.msra.mxu0 0.0
    %106 = vmatpush.msra.mxu0 0.0
    %107 = vmatpush.msra.mxu0 0.0
    %108 = vmatpush.msra.mxu0 0.0
    %109 = vmatpush.msra.mxu0 0.0
    %110 = vmatpush.msra.mxu0 0.0
    %111 = vmatpush.msra.mxu0 0.0
    %112 = vmatpush.msra.mxu0 0.0
    %113 = vmatpush.msra.mxu0 0.0
    %114 = vmatpush.msra.mxu0 0.0
    %115 = vmatpush.msra.mxu0 0.0
    %116 = vmatpush.msra.mxu0 0.0
    %117 = vmatpush.msra.mxu0 0.0
    %118 = vmatpush.msra.mxu0 0.0
    %119 = vmatpush.msra.mxu0 0.0
    %120 = vmatpush.msra.mxu0 %v56
    %121 = vmatmul.f32.gmra.mxu0 %v100
    %v122 = vpop.f32.mrf.mxu0
    %v123 = vadd.f32 0.0, %v122
    %124 = vmatmul.f32.gmra.mxu0 %v103
    %v125 = vpop.f32.mrf.mxu0
    %v126 = vadd.f32 0.0, %v125
    %127 = vdwg.mxu0
    %vm128 = vcmask 261120
    %v130 = vsel %vm128, %v50, 0
    %132 = vmatpush.msra.mxu0 0.0
    %133 = vmatpush.msra.mxu0 0.0
    %134 = vmatpush.msra.mxu0 0.0
    %135 = vmatpush.msra.mxu0 0.0
    %136 = vmatpush.msra.mxu0 0.0
    %137 = vmatpush.msra.mxu0 0.0
    %138 = vmatpush.msra.mxu0 0.0
    %139 = vmatpush.msra.mxu0 0.0
    %140 = vmatpush.msra.mxu0 0.0
    %141 = vmatpush.msra.mxu0 0.0
    %142 = vmatpush.msra.mxu0 0.0
    %143 = vmatpush.msra.mxu0 0.0
    %144 = vmatpush.msra.mxu0 %v62
    %145 = vmatpush.msra.mxu0 %v61
    %146 = vmatpush.msra.mxu0 %v60
    %147 = vmatpush.msra.mxu0 %v59
    %148 = vmatmul.f32.gmra.mxu0 %v130
    %v149 = vpop.f32.mrf.mxu0
    %v150 = vadd.f32 0.0, %v149
    %151 = vdwg.mxu0
    %v153 = vsel %vm128, %v46, 0
    %v156 = vsel %vm128, %v47, 0
    %v159 = vsel %vm128, %v48, 0
    %v162 = vsel %vm128, %v49, 0
    %164 = vmatpush.msra.mxu0 0.0
    %165 = vmatpush.msra.mxu0 0.0
    %166 = vmatpush.msra.mxu0 0.0
    %167 = vmatpush.msra.mxu0 0.0
    %168 = vmatpush.msra.mxu0 0.0
    %169 = vmatpush.msra.mxu0 0.0
    %170 = vmatpush.msra.mxu0 0.0
    %171 = vmatpush.msra.mxu0 0.0
    %172 = vmatpush.msra.mxu0 0.0
    %173 = vmatpush.msra.mxu0 0.0
    %174 = vmatpush.msra.mxu0 0.0
    %175 = vmatpush.msra.mxu0 0.0
    %176 = vmatpush.msra.mxu0 %v67
    %177 = vmatpush.msra.mxu0 %v66
    %178 = vmatpush.msra.mxu0 %v65
    %179 = vmatpush.msra.mxu0 %v64
    %180 = vmatmul.f32.gmra.mxu0 %v153
    %v181 = vpop.f32.mrf.mxu0
    %v182 = vadd.f32 0.0, %v181
    %183 = vmatmul.f32.gmra.mxu0 %v156
    %v184 = vpop.f32.mrf.mxu0
    %v185 = vadd.f32 0.0, %v184
    %186 = vmatmul.f32.gmra.mxu0 %v159
    %v187 = vpop.f32.mrf.mxu0
    %v188 = vadd.f32 0.0, %v187
    %189 = vmatmul.f32.gmra.mxu0 %v162
    %v190 = vpop.f32.mrf.mxu0
    %v191 = vadd.f32 0.0, %v190
    %192 = vdwg.mxu0
    %v193 = vperm.slane %v68, 0
    %v194 = vadd.f32 %v182, %v193
    %v195 = vadd.f32 %v185, %v193
    %v196 = vadd.f32 %v188, %v193
    %v197 = vadd.f32 %v191, %v193
    %v199 = vrot.slane %v150, 1
    %v200 = vperm.slane %v150, 0
    %v201 = vperm.slane %v199, 0
    %v204 = vadd.f32 %v194, %v200
    %v205 = vadd.f32 %v195, %v200
    %v206 = vadd.f32 %v196, %v201
    %v207 = vadd.f32 %v197, %v201
    %209 = vset.pattern.permute.xlu0 0
    %210 = vperm.xlu0 %209, %v94
    %v211 = vpop.permute.xlu0 %210
    %214 = vset.pattern.permute.xlu0 0
    %215 = vperm.xlu0 %214, %v97
    %v216 = vpop.permute.xlu0 %215
    %219 = vset.pattern.permute.xlu0 0
    %220 = vperm.xlu0 %219, %v123
    %v221 = vpop.permute.xlu0 %220
    %224 = vset.pattern.permute.xlu0 0
    %225 = vperm.xlu0 %224, %v126
    %v226 = vpop.permute.xlu0 %225
    %v228 = vperm.slane %v68, 1
    %v229 = vmul.f32 %v211, %v228
    %v230 = vmul.f32 %v216, %v228
    %v231 = vmul.f32 %v221, %v228
    %v232 = vmul.f32 %v226, %v228
    %v233 = vadd.f32 %v204, %v229
    %v234 = vadd.f32 %v205, %v230
    %v235 = vadd.f32 %v206, %v231
    %v236 = vadd.f32 %v207, %v232
    %v237 = vtanh.pop %v233
    %v238 = vtanh.pop %v234
    %v239 = vtanh.pop %v235
    %v240 = vtanh.pop %v236
    %v242 = vrot.slane %v68, 2
    %v243 = vsel %vm128, %v242, 0
    %v246 = vsel %vm128, %v237, 0
    %v249 = vsel %vm128, %v238, 0
    %251 = vmatpush.xpose.msra.mxu0 0.0
    %252 = vmatpush.xpose.msra.mxu0 0.0
    %253 = vmatpush.xpose.msra.mxu0 0.0
    %254 = vmatpush.xpose.msra.mxu0 0.0
    %255 = vmatpush.xpose.msra.mxu0 0.0
    %256 = vmatpush.xpose.msra.mxu0 0.0
    %257 = vmatpush.xpose.msra.mxu0 0.0
    %258 = vmatpush.xpose.msra.mxu0 0.0
    %259 = vmatpush.xpose.msra.mxu0 0.0
    %260 = vmatpush.xpose.msra.mxu0 0.0
    %261 = vmatpush.xpose.msra.mxu0 0.0
    %262 = vmatpush.xpose.msra.mxu0 0.0
    %263 = vmatpush.xpose.msra.mxu0 0.0
    %264 = vmatpush.xpose.msra.mxu0 0.0
    %265 = vmatpush.xpose.msra.mxu0 %v249
    %266 = vmatpush.xpose.msra.mxu0 %v246
    %267 = vmatmul.f32.gmra.mxu0 %v243
    %v268 = vpop.f32.mrf.mxu0
    %v269 = vadd.f32 0.0, %v268
    %270 = vdwg.mxu0
    %v272 = vsel %vm128, %v239, 0
    %v275 = vsel %vm128, %v240, 0
    %277 = vmatpush.xpose.msra.mxu0 0.0
    %278 = vmatpush.xpose.msra.mxu0 0.0
    %279 = vmatpush.xpose.msra.mxu0 0.0
    %280 = vmatpush.xpose.msra.mxu0 0.0
    %281 = vmatpush.xpose.msra.mxu0 0.0
    %282 = vmatpush.xpose.msra.mxu0 0.0
    %283 = vmatpush.xpose.msra.mxu0 0.0
    %284 = vmatpush.xpose.msra.mxu0 0.0
    %285 = vmatpush.xpose.msra.mxu0 0.0
    %286 = vmatpush.xpose.msra.mxu0 0.0
    %287 = vmatpush.xpose.msra.mxu0 0.0
    %288 = vmatpush.xpose.msra.mxu0 0.0
    %289 = vmatpush.xpose.msra.mxu0 0.0
    %290 = vmatpush.xpose.msra.mxu0 0.0
    %291 = vmatpush.xpose.msra.mxu0 %v275
    %292 = vmatpush.xpose.msra.mxu0 %v272
    %293 = vmatmul.f32.gmra.mxu0 %v243
    %v294 = vpop.f32.mrf.mxu0
    %v295 = vadd.f32 0.0, %v294
    %296 = vdwg.mxu0
    %vm297 = vcmp.gt.f32.partialorder %v57, 0.5
    %vm298 = vcmp.gt.f32.partialorder %v58, 0.5
    %v299 = vsel %vm297, -700.0, %v269
    %v300 = vsel %vm298, -700.0, %v295
    %vm301 = vcmask 122880
    %v302 = vsel %vm301, %v299, -inf
    %303 = vmax.xlane.f32.xlu0 %v302
    %v304 = vpop.xlane.xlu0 %303
    %v305 = vsel %vm301, %v300, -inf
    %306 = vmax.xlane.f32.xlu0 %v305
    %v307 = vpop.xlane.xlu0 %306
    %v308 = vsub.f32 %v299, %v304
    %v309 = vsub.f32 %v300, %v307
    %v310 = vmul.f32 %v308, 1.442695
    %v311 = vpow.pop %v310
    %v312 = vmul.f32 %v309, 1.442695
    %v313 = vpow.pop %v312
    %v314 = vsel %vm301, %v311, 0.0
    %315 = vadd.xlane.f32.xlu0 %v314
    %v316 = vpop.xlane.xlu0 %315
    %v317 = vsel %vm301, %v313, 0.0
    %318 = vadd.xlane.f32.xlu0 %v317
    %v319 = vpop.xlane.xlu0 %318
    %v320 = vrcp.pop %v316
    %v321 = vmul.f32 %v316, %v320
    %v322 = vsub.f32 1.0, %v321
    %v323 = vmul.f32 %v320, %v322
    %v324 = vadd.f32 %v320, %v323
    %vm325 = vweird.f32 %v316
    %vm326 = vweird.f32 %v320
    %vm327 = vmor %vm325, %vm326
    %v328 = vsel %vm327, %v320, %v324
    %v329 = vand.u32 2147483647, %v316
    %vm330 = vcmp.eq.f32.partialorder %v329, 8.507059e+37
    %v331 = vand.u32 %v316, 2147483648
    %v332 = vor.u32 1.1754944e-38, %v331
    %v333 = vsel %vm330, %v332, %v328
    %v334 = vrcp.pop %v319
    %v335 = vmul.f32 %v319, %v334
    %v336 = vsub.f32 1.0, %v335
    %v337 = vmul.f32 %v334, %v336
    %v338 = vadd.f32 %v334, %v337
    %vm339 = vweird.f32 %v319
    %vm340 = vweird.f32 %v334
    %vm341 = vmor %vm339, %vm340
    %v342 = vsel %vm341, %v334, %v338
    %v343 = vand.u32 2147483647, %v319
    %vm344 = vcmp.eq.f32.partialorder %v343, 8.507059e+37
    %v345 = vand.u32 %v319, 2147483648
    %v346 = vor.u32 1.1754944e-38, %v345
    %v347 = vsel %vm344, %v346, %v342
    %v348 = vmul.f32 %v311, %v333
    %v349 = vmul.f32 %v313, %v347
    %vm350 = vcmask 130048
    %v352 = vsel %vm350, %v348, 0
    %354 = vmatpush.msra.mxu0 0.0
    %355 = vmatpush.msra.mxu0 0.0
    %356 = vmatpush.msra.mxu0 0.0
    %357 = vmatpush.msra.mxu0 0.0
    %358 = vmatpush.msra.mxu0 0.0
    %359 = vmatpush.msra.mxu0 0.0
    %360 = vmatpush.msra.mxu0 0.0
    %361 = vmatpush.msra.mxu0 0.0
    %362 = vmatpush.msra.mxu0 0.0
    %363 = vmatpush.msra.mxu0 0.0
    %364 = vmatpush.msra.mxu0 0.0
    %365 = vmatpush.msra.mxu0 0.0
    %366 = vmatpush.msra.mxu0 0.0
    %367 = vmatpush.msra.mxu0 0.0
    %368 = vmatpush.msra.mxu0 %v47
    %369 = vmatpush.msra.mxu0 %v46
    %370 = vmatmul.f32.gmra.mxu0 %v352
    %v371 = vpop.f32.mrf.mxu0
    %v372 = vadd.f32 0.0, %v371
    %373 = vdwg.mxu0
    %v375 = vsel %vm350, %v349, 0
    %377 = vmatpush.msra.mxu0 0.0
    %378 = vmatpush.msra.mxu0 0.0
    %379 = vmatpush.msra.mxu0 0.0
    %380 = vmatpush.msra.mxu0 0.0
    %381 = vmatpush.msra.mxu0 0.0
    %382 = vmatpush.msra.mxu0 0.0
    %383 = vmatpush.msra.mxu0 0.0
    %384 = vmatpush.msra.mxu0 0.0
    %385 = vmatpush.msra.mxu0 0.0
    %386 = vmatpush.msra.mxu0 0.0
    %387 = vmatpush.msra.mxu0 0.0
    %388 = vmatpush.msra.mxu0 0.0
    %389 = vmatpush.msra.mxu0 0.0
    %390 = vmatpush.msra.mxu0 0.0
    %391 = vmatpush.msra.mxu0 %v49
    %392 = vmatpush.msra.mxu0 %v48
    %393 = vmatmul.f32.gmra.mxu0 %v375
    %v394 = vpop.f32.mrf.mxu0
    %v395 = vadd.f32 0.0, %v394
    %396 = vdwg.mxu0
    %vm397 = vcmask 253952
    %398 = vst.msk [vmem:[#allocation5] sm:$0x1] %vm397, %v372
    %399 = vst.msk [vmem:[#allocation5 + $0x1] sm:$0x1] %vm397, %v395
    %400 = vst.msk [vmem:[#allocation6] sm:$0x1] %vm301, %v348
    %401 = vst.msk [vmem:[#allocation6 + $0x1] sm:$0x1] %vm301, %v349
    // Predicated region
    $region34: #{tpu_custom_call.1} parent=1 // pred_check
      _
    $region35: #{tpu_custom_call.1} parent=1 // pred_check_branch
      %403 = sbr.rel (0) target = $region37
    $region36: #{tpu_custom_call.1} parent=1 // pred_region
      %405 = vsyncadd [#allocation4], 0
      %s406 = sshll.u32 [#allocation5], 4
      %s407 = int_to_ptr.vmem [resolvable:$true] %s406
      %s408 = sshll.u32 %s7, 4
      %s409 = int_to_ptr.hbm [resolvable:$true] %s408
      %414 = dma.vmem_to_hbm [thread:$0]  %s407, 32, %s409, [#allocation4], 16, 16, 1
    $region37: #{tpu_custom_call.1} parent=1 // pred_fallthru
      _
    // Predicated region
    $region38: #{tpu_custom_call.1} parent=1 // pred_check
      _
    $region39: #{tpu_custom_call.1} parent=1 // pred_check_branch
      %416 = sbr.rel (0) target = $region41
    $region40: #{tpu_custom_call.1} parent=1 // pred_region
      %418 = vsyncadd [#allocation7], 0
      %s419 = sshll.u32 [#allocation6], 4
      %s420 = int_to_ptr.vmem [resolvable:$true] %s419
      %s421 = sshll.u32 %s8, 4
      %s422 = int_to_ptr.hbm [resolvable:$true] %s421
      %427 = dma.vmem_to_hbm [thread:$0]  %s420, 32, %s422, [#allocation7], 16, 16, 1
    $region41: #{tpu_custom_call.1} parent=1 // pred_fallthru
      _
    // Predicated region
    $region42: #{tpu_custom_call.1} parent=1 // pred_check
      _
    $region43: #{tpu_custom_call.1} parent=1 // pred_check_branch
      %429 = sbr.rel (0) target = $region45
    $region44: #{tpu_custom_call.1} parent=1 // pred_region
      %431 = dma.done [#allocation4], 32
    $region45: #{tpu_custom_call.1} parent=1 // pred_fallthru
      _
    // Predicated region
    $region46: #{tpu_custom_call.1} parent=1 // pred_check
      _
    $region47: #{tpu_custom_call.1} parent=1 // pred_check_branch
      %433 = sbr.rel (0) target = $region49
    $region48: #{tpu_custom_call.1} parent=1 // pred_region
      %435 = dma.done [#allocation7], 32
    $region49: #{tpu_custom_call.1} parent=1 // pred_fallthru
      _
    %436 = vsyncpa [#allocation3], 1
    %437 = vsyncpa [#allocation4], 1
    %438 = vsyncpa [#allocation7], 1

</llo_original>
